<compile_context>
chip_gen: v6e
topology: v6e:2x2x1
jax: 0.10.0
libtpu: 0.0.40
codegen_flags: <defaults>
</compile_context>

<pallas_src>
import functools

import jax
import jax.numpy as jnp
import numpy as np
from jax.experimental import pallas as pl
from jax.experimental.pallas import tpu as pltpu


# --------------------------------------------------------------------------- #
# Device-aware sizing helpers
# --------------------------------------------------------------------------- #
def _device_kind():
    try:
        return jax.devices()[0].device_kind.lower()
    except Exception:
        return ""


def _vmem_capacity_bytes(kind):
    if "v7" in kind:
        return 64 << 20            # v7x: 64 MiB per TensorCore
    if any(v in kind for v in ("v4", "v5", "v6")):
        return 128 << 20
    return 64 << 20                # unknown chip: be conservative


def _supports_bf16_valu(kind):
    # v6e / v7x have bf16 VALU; v5e (and older) do not -> keep f32 math there.
    return ("v6" in kind) or ("v7" in kind)


def _choose_tile_s(S, C, itemsize, N, vmem_cap):
    """Return (tile_s, fused).

    fused=True  -> one full-slab grid cell per batch element, cSE pool in-kernel.
    fused=False -> tiled streaming apply (two-pass), tile_s columns per step.
    """
    # Per-column VMEM cost of one grid step:
    #   2 in + 2 out pipelined buffers in the I/O dtype
    #   + ~3 full-tile f32 temporaries in the body (x upcast, x*ws product, gate).
    per_col = C * (4 * itemsize + 3 * 4)
    budget = int(vmem_cap * 0.55)          # headroom for weights / compiler scratch
    ts_max = max((budget // per_col) // 128 * 128, 128)

    slab_fits = S * per_col <= budget
    if slab_fits and (N >= 2 or S < 256):
        # Fused single-pass path.  With N >= 2 both v7x TensorCores still get a
        # grid cell each; with S < 256 there is no lane-dense way to split anyway.
        return S, True

    # Tiled two-pass path: prefer a 128-multiple divisor of S (unmasked, lane-dense
    # output stores, no short final step).
    divs = [d for d in range(128, min(S, ts_max) + 1, 128) if S % d == 0]
    if divs:
        if N == 1:
            multi = [d for d in divs if S // d >= 2]          # keep both v7x TCs busy
            if multi:
                even = [d for d in multi if (S // d) % 2 == 0]
                return (max(even) if even else max(multi)), False
        return max(divs), False

    # Fallback: no 128-multiple divisor of S; Pallas masks the padded final block
    # on store, which is correct (sSE runs on padded garbage but is masked out).
    n_tiles = 2 if N == 1 else 1
    ts = max(pl.cdiv(pl.cdiv(S, n_tiles), 128) * 128, 128)
    return min(ts, ts_max), False


# --------------------------------------------------------------------------- #
# Kernels
# --------------------------------------------------------------------------- #
def _scse_fused_kernel(x_ref, w1t_ref, b1_ref, w2_ref, b2_ref, ws_ref, bs_ref,
                       o_ref, *, inv_s, bf16_math):
    """Single pass per batch element: pool + cSE MLP + sSE + combined apply.

    x_ref/o_ref: (C, S) with channels on sublanes, spatial on lanes.
    w1t (C, Cr), b1 (1, Cr), w2 (C, Cr), b2 (C, 1), ws (C, 1) f32; bs (1,) in SMEM.
    """
    x = x_ref[...]
    xf = x.astype(jnp.float32)

    # cSE: global average pool over the spatial (lane) axis, then the tiny 2-layer
    # MLP as VPU broadcast-multiplies + XLU reduces (no degenerate M/N=1 matmuls).
    pooled = jnp.sum(xf, axis=1, keepdims=True) * inv_s                      # (C, 1)
    h = jnp.tanh(jnp.sum(w1t_ref[...] * pooled, axis=0, keepdims=True)
                 + b1_ref[...])                                              # (1, Cr)
    cse = jax.nn.sigmoid(jnp.sum(w2_ref[...] * h, axis=1, keepdims=True)
                         + b2_ref[...])                                      # (C, 1)

    # sSE: per-voxel channel projection (C -> 1) as multiply + cross-sublane reduce.
    # NOTE: for C >> 128 this reduce plus the gate broadcast could saturate the XLU
    # before the HBM roofline; keep the x*cse + x*sse form / a roll-add tree then.
    sse = jax.nn.sigmoid(jnp.sum(xf * ws_ref[...], axis=0, keepdims=True)
                         + bs_ref[0])                                        # (1, S)

    # Fused combine: x*cSE + x*sSE == x * (cSE + sSE).  On v6e/v7x with bf16 I/O the
    # broadcast + final multiply run in bf16 (half the VALU ops / live bytes).
    if bf16_math:
        gate = cse.astype(x.dtype) + sse.astype(x.dtype)                     # (C, S)
    else:
        gate = cse + sse
    o_ref[...] = (x * gate).astype(o_ref.dtype)


def _scse_apply_kernel(x_ref, cse_ref, ws_ref, bs_ref, o_ref, *, bf16_math):
    """Streaming apply over one (C, TS) spatial tile; cSE gate precomputed."""
    x = x_ref[...]
    xf = x.astype(jnp.float32)
    sse = jax.nn.sigmoid(jnp.sum(xf * ws_ref[...], axis=0, keepdims=True)
                         + bs_ref[0])                                        # (1, TS)
    cse = cse_ref[...]                                                       # (C, 1)
    if bf16_math:
        gate = cse.astype(x.dtype) + sse.astype(x.dtype)
    else:
        gate = cse + sse
    o_ref[...] = (x * gate).astype(o_ref.dtype)


# --------------------------------------------------------------------------- #
# Wrapper
# --------------------------------------------------------------------------- #
def scse_forward(x, params, *, tile_s=None):
    """x: (N, C, D, H, W) float32 or bfloat16.
    params: (w1, b1, w2, b2, ws, bs) with 2D shapes (1x1x1 convs flattened)."""
    w1, b1, w2, b2, ws, bs = params
    N, C, D, H, W = x.shape
    S = D * H * W
    Cr = w1.shape[0]
    out_dtype = x.dtype
    itemsize = jnp.dtype(x.dtype).itemsize
    x2 = x.reshape(N, C, S)

    kind = _device_kind()
    vmem_cap = _vmem_capacity_bytes(kind)
    bf16_math = (x.dtype == jnp.bfloat16) and _supports_bf16_valu(kind)

    if tile_s is not None:
        ts = min(int(tile_s), S)
        fused = ts >= S
    else:
        ts, fused = _choose_tile_s(S, C, itemsize, N, vmem_cap)

    ws_c = jnp.asarray(ws, jnp.float32).reshape(C, 1)     # channel on sublanes
    bs_s = jnp.asarray(bs, jnp.float32).reshape(1)        # scalar bias -> SMEM

    # VMEM footprint: pipelined buffers + ~3 full-tile f32 temporaries + headroom.
    footprint = 4 * C * ts * itemsize + 3 * C * ts * 4 + (2 << 20)
    vmem_limit = int(min(max(footprint, 16 << 20), int(vmem_cap * 0.85)))

    if fused:
        w1t = jnp.asarray(w1, jnp.float32).T              # (C, Cr)
        b1r = jnp.asarray(b1, jnp.float32).reshape(1, Cr)
        w2r = jnp.asarray(w2, jnp.float32).reshape(C, Cr)
        b2r = jnp.asarray(b2, jnp.float32).reshape(C, 1)

        cost = pl.CostEstimate(
            flops=6 * N * C * S,
            transcendentals=N * (S + C + Cr),
            bytes_accessed=2 * N * C * S * itemsize,
        )
        kern = functools.partial(_scse_fused_kernel, inv_s=1.0 / S,
                                 bf16_math=bf16_math)
        out = pl.pallas_call(
            kern,
            out_shape=jax.ShapeDtypeStruct((N, C, S), out_dtype),
            grid=(N,),
            in_specs=[
                pl.BlockSpec((None, C, S), lambda n: (n, 0, 0)),     # x slab
                pl.BlockSpec((C, Cr), lambda n: (0, 0)),             # w1^T
                pl.BlockSpec((1, Cr), lambda n: (0, 0)),             # b1
                pl.BlockSpec((C, Cr), lambda n: (0, 0)),             # w2
                pl.BlockSpec((C, 1), lambda n: (0, 0)),              # b2
                pl.BlockSpec((C, 1), lambda n: (0, 0)),              # sSE weight
                pl.BlockSpec(memory_space=pltpu.MemorySpace.SMEM),   # sSE bias
            ],
            out_specs=pl.BlockSpec((None, C, S), lambda n: (n, 0, 0)),
            compiler_params=pltpu.CompilerParams(
                dimension_semantics=("parallel",),
                vmem_limit_bytes=vmem_limit,
            ),
            cost_estimate=cost,
        )(x2, w1t, b1r, w2r, b2r, ws_c, bs_s)
        return out.reshape(N, C, D, H, W)

    # ---- Tiled two-pass path: tiny cSE gate hoisted to XLA (f32 accumulation,
    #      no materialized f32 copy of x), streaming apply kernel over spatial tiles.
    pooled = jnp.mean(x2, axis=2, dtype=jnp.float32)                         # (N, C)
    h = jnp.tanh(pooled @ jnp.asarray(w1, jnp.float32).T
                 + jnp.asarray(b1, jnp.float32)[:, 0])                       # (N, Cr)
    cse = jax.nn.sigmoid(h @ jnp.asarray(w2, jnp.float32).T
                         + jnp.asarray(b2, jnp.float32)[:, 0])               # (N, C)
    cse = cse[:, :, None]                                                    # (N, C, 1)

    grid = (N, pl.cdiv(S, ts))
    cost = pl.CostEstimate(
        flops=4 * N * C * S,
        transcendentals=N * S,
        bytes_accessed=2 * N * C * S * itemsize,
    )
    kern = functools.partial(_scse_apply_kernel, bf16_math=bf16_math)
    out = pl.pallas_call(
        kern,
        out_shape=jax.ShapeDtypeStruct((N, C, S), out_dtype),
        grid=grid,
        in_specs=[
            pl.BlockSpec((None, C, ts), lambda n, s: (n, 0, s)),     # x tile
            pl.BlockSpec((None, C, 1), lambda n, s: (n, 0, 0)),      # cSE gate
            pl.BlockSpec((C, 1), lambda n, s: (0, 0)),               # sSE weight
            pl.BlockSpec(memory_space=pltpu.MemorySpace.SMEM),       # sSE bias
        ],
        out_specs=pl.BlockSpec((None, C, ts), lambda n, s: (n, 0, s)),
        compiler_params=pltpu.CompilerParams(
            dimension_semantics=("parallel", "parallel"),
            vmem_limit_bytes=vmem_limit,
        ),
        cost_estimate=cost,
    )(x2, cse, ws_c, bs_s)
    return out.reshape(N, C, D, H, W)


# --------------------------------------------------------------------------- #
# Pure-JAX reference matching the PyTorch forward semantics.
# --------------------------------------------------------------------------- #
def reference(x, params):
    w1, b1, w2, b2, ws, bs = params
    xf = x.astype(jnp.float32)
    pooled = jnp.mean(xf, axis=(2, 3, 4))                             # (N, C)
    h = jnp.tanh(pooled @ w1.T + b1[:, 0])                            # (N, Cr)
    cse = jax.nn.sigmoid(h @ w2.T + b2[:, 0])                         # (N, C)
    sse = jax.nn.sigmoid(
        jnp.einsum("ncdhw,c->ndhw", xf, ws[0]) + bs[0, 0]
    )                                                                 # (N, D, H, W)
    return xf * cse[:, :, None, None, None] + xf * sse[:, None, :, :, :]


def init_params(key, in_channels, reduction=16):
    """Deterministic synthetic weights with the shapes nn.Conv3d(..., 1) would have,
    flattened from (out, in, 1, 1, 1) to (out, in)."""
    cr = max(in_channels // reduction, 1)
    k1, k2, k3, k4, k5, k6 = jax.random.split(key, 6)
    w1 = jax.random.normal(k1, (cr, in_channels), jnp.float32) * 0.2
    b1 = jax.random.normal(k2, (cr, 1), jnp.float32) * 0.1
    w2 = jax.random.normal(k3, (in_channels, cr), jnp.float32) * 0.2
    b2 = jax.random.normal(k4, (in_channels, 1), jnp.float32) * 0.1
    ws = jax.random.normal(k5, (1, in_channels), jnp.float32) * 0.2
    bs = jax.random.normal(k6, (1, 1), jnp.float32) * 0.1
    return (w1, b1, w2, b2, ws, bs)


if __name__ == "__main__":
    key = jax.random.PRNGKey(0)
    k_x, k_p, k_x2 = jax.random.split(key, 3)

    # ---- main case: N=2, C=32, reduction=16 -> hidden=2, S = 8*8*8 = 512.
    # Auto-selects the FUSED single-pass path (slab fits VMEM, N >= 2).
    N, C, D, H, W = 2, 32, 8, 8, 8
    x = jax.random.normal(k_x, (N, C, D, H, W), jnp.float32)
    params = init_params(k_p, C, reduction=16)

    out = jax.block_until_ready(scse_forward(x, params))
    ref = jax.block_until_ready(reference(x, params))
    np.testing.assert_allclose(np.asarray(out), np.asarray(ref), rtol=1e-4, atol=1e-5)

    # ---- tiled two-pass path, auto-chosen (N=1, S=2048 -> even tile count).
    N2, C2, D2, H2, W2 = 1, 16, 8, 8, 32
    x2 = jax.random.normal(k_x2, (N2, C2, D2, H2, W2), jnp.float32)
    params2 = init_params(k_p, C2, reduction=16)
    out2a = jax.block_until_ready(scse_forward(x2, params2))
    ref2 = jax.block_until_ready(reference(x2, params2))
    np.testing.assert_allclose(np.asarray(out2a), np.asarray(ref2), rtol=1e-4, atol=1e-5)

    # ---- tiled path with explicit divisor tile (4 lane-dense tiles).
    out2b = jax.block_until_ready(scse_forward(x2, params2, tile_s=512))
    np.testing.assert_allclose(np.asarray(out2b), np.asarray(ref2), rtol=1e-4, atol=1e-5)

    # ---- tiled path with a non-divisor tile (exercises masked final-block stores).
    out2c = jax.block_until_ready(scse_forward(x2, params2, tile_s=768))
    np.testing.assert_allclose(np.asarray(out2c), np.asarray(ref2), rtol=1e-4, atol=1e-5)

    # ---- bf16 path: bf16 in/out (bf16 combine on v6e/v7x, f32 on v5e), fused.
    xb = x.astype(jnp.bfloat16)
    outb = jax.block_until_ready(scse_forward(xb, params))
    np.testing.assert_allclose(
        np.asarray(outb.astype(jnp.float32)), np.asarray(ref), rtol=5e-2, atol=1e-1
    )

    print("KERNEL_OK")
</pallas_src>

<mosaic_0001>
module attributes {stable_mosaic.version = 11 : i64} {
  func.func @_scse_fused_kernel(%arg0: i32, %arg1: memref<1x32x512xf32, #tpu.memory_space<vmem>>, %arg2: memref<32x2xf32, #tpu.memory_space<vmem>>, %arg3: memref<1x2xf32, #tpu.memory_space<vmem>>, %arg4: memref<32x2xf32, #tpu.memory_space<vmem>>, %arg5: memref<32x1xf32, #tpu.memory_space<vmem>>, %arg6: memref<32x1xf32, #tpu.memory_space<vmem>>, %arg7: memref<1xf32, #tpu.memory_space<smem>>, %arg8: memref<1x32x512xf32, #tpu.memory_space<vmem>>) attributes {dimension_semantics = [#tpu.dimension_semantics<parallel>], iteration_bounds = array<i64: 2>, scalar_prefetch = 0 : i64, scratch_operands = 0 : i64, tpu.core_type = #tpu.core_type<tc>, window_params = [{transform_indices = @transform_0, window_bounds = array<i64: 1, 32, 512>}, {pipeline_mode = #tpu.pipeline_mode<synchronous>, transform_indices = @transform_1, window_bounds = array<i64: 32, 2>}, {pipeline_mode = #tpu.pipeline_mode<synchronous>, transform_indices = @transform_2, window_bounds = array<i64: 1, 2>}, {pipeline_mode = #tpu.pipeline_mode<synchronous>, transform_indices = @transform_3, window_bounds = array<i64: 32, 2>}, {pipeline_mode = #tpu.pipeline_mode<synchronous>, transform_indices = @transform_4, window_bounds = array<i64: 32, 1>}, {pipeline_mode = #tpu.pipeline_mode<synchronous>, transform_indices = @transform_5, window_bounds = array<i64: 32, 1>}, {transform_indices = @transform_6, window_bounds = array<i64: 1>}, {transform_indices = @transform_7, window_bounds = array<i64: 1, 32, 512>}]} {
    %c0 = arith.constant 0 : index
    %c0_0 = arith.constant 0 : index
    %c0_1 = arith.constant 0 : index
    %0 = vector.load %arg1[%c0, %c0_0, %c0_1] : memref<1x32x512xf32, #tpu.memory_space<vmem>>, vector<1x32x512xf32>
    %1 = vector.shape_cast %0 : vector<1x32x512xf32> to vector<32x512xf32>
    %cst = arith.constant dense<0.000000e+00> : vector<32xf32>
    %2 = vector.multi_reduction <add>, %1, %cst [1] : vector<32x512xf32> to vector<32xf32>
    %3 = vector.shape_cast %2 : vector<32xf32> to vector<32x1xf32>
    %cst_2 = arith.constant 0.001953125 : f32
    %4 = vector.broadcast %cst_2 : f32 to vector<32x1xf32>
    %5 = arith.mulf %3, %4 : vector<32x1xf32>
    %c0_3 = arith.constant 0 : index
    %c0_4 = arith.constant 0 : index
    %6 = vector.load %arg2[%c0_3, %c0_4] : memref<32x2xf32, #tpu.memory_space<vmem>>, vector<32x2xf32>
    %7 = vector.broadcast %5 : vector<32x1xf32> to vector<32x2xf32>
    %8 = arith.mulf %6, %7 : vector<32x2xf32>
    %cst_5 = arith.constant dense<0.000000e+00> : vector<2xf32>
    %9 = vector.multi_reduction <add>, %8, %cst_5 [0] : vector<32x2xf32> to vector<2xf32>
    %10 = vector.shape_cast %9 : vector<2xf32> to vector<1x2xf32>
    %c0_6 = arith.constant 0 : index
    %c0_7 = arith.constant 0 : index
    %11 = vector.load %arg3[%c0_6, %c0_7] : memref<1x2xf32, #tpu.memory_space<vmem>>, vector<1x2xf32>
    %12 = arith.addf %10, %11 : vector<1x2xf32>
    %13 = math.tanh %12 : vector<1x2xf32>
    %c0_8 = arith.constant 0 : index
    %c0_9 = arith.constant 0 : index
    %14 = vector.load %arg4[%c0_8, %c0_9] : memref<32x2xf32, #tpu.memory_space<vmem>>, vector<32x2xf32>
    %15 = vector.broadcast %13 : vector<1x2xf32> to vector<32x2xf32>
    %16 = arith.mulf %14, %15 : vector<32x2xf32>
    %cst_10 = arith.constant dense<0.000000e+00> : vector<32xf32>
    %17 = vector.multi_reduction <add>, %16, %cst_10 [1] : vector<32x2xf32> to vector<32xf32>
    %18 = vector.shape_cast %17 : vector<32xf32> to vector<32x1xf32>
    %c0_11 = arith.constant 0 : index
    %c0_12 = arith.constant 0 : index
    %19 = vector.load %arg5[%c0_11, %c0_12] : memref<32x1xf32, #tpu.memory_space<vmem>>, vector<32x1xf32>
    %20 = arith.addf %18, %19 : vector<32x1xf32>
    %21 = arith.negf %20 : vector<32x1xf32>
    %22 = math.exp %21 : vector<32x1xf32>
    %cst_13 = arith.constant 1.000000e+00 : f32
    %23 = vector.broadcast %cst_13 : f32 to vector<32x1xf32>
    %24 = arith.addf %23, %22 : vector<32x1xf32>
    %25 = arith.divf %23, %24 : vector<32x1xf32>
    %c0_14 = arith.constant 0 : index
    %c0_15 = arith.constant 0 : index
    %26 = vector.load %arg6[%c0_14, %c0_15] : memref<32x1xf32, #tpu.memory_space<vmem>>, vector<32x1xf32>
    %27 = vector.broadcast %26 : vector<32x1xf32> to vector<32x512xf32>
    %28 = arith.mulf %1, %27 : vector<32x512xf32>
    %cst_16 = arith.constant dense<0.000000e+00> : vector<512xf32>
    %29 = vector.multi_reduction <add>, %28, %cst_16 [0] : vector<32x512xf32> to vector<512xf32>
    %30 = vector.shape_cast %29 : vector<512xf32> to vector<1x512xf32>
    %c0_17 = arith.constant 0 : index
    %31 = memref.load %arg7[%c0_17] : memref<1xf32, #tpu.memory_space<smem>>
    %32 = vector.broadcast %31 : f32 to vector<1x512xf32>
    %33 = arith.addf %30, %32 : vector<1x512xf32>
    %34 = arith.negf %33 : vector<1x512xf32>
    %35 = math.exp %34 : vector<1x512xf32>
    %cst_18 = arith.constant 1.000000e+00 : f32
    %36 = vector.broadcast %cst_18 : f32 to vector<1x512xf32>
    %37 = arith.addf %36, %35 : vector<1x512xf32>
    %38 = arith.divf %36, %37 : vector<1x512xf32>
    %39 = vector.broadcast %25 : vector<32x1xf32> to vector<32x512xf32>
    %40 = vector.broadcast %38 : vector<1x512xf32> to vector<32x512xf32>
    %41 = arith.addf %39, %40 : vector<32x512xf32>
    %42 = arith.mulf %1, %41 : vector<32x512xf32>
    %c0_19 = arith.constant 0 : index
    %c0_20 = arith.constant 0 : index
    %c0_21 = arith.constant 0 : index
    %43 = vector.load %arg8[%c0_19, %c0_20, %c0_21] : memref<1x32x512xf32, #tpu.memory_space<vmem>>, vector<1x32x512xf32>
    %44 = vector.shape_cast %43 : vector<1x32x512xf32> to vector<32x512xf32>
    %45 = vector.shape_cast %42 : vector<32x512xf32> to vector<1x32x512xf32>
    tpu.vector_store %arg8[%c0_19, %c0_20, %c0_21], %45 {strides = array<i32>} : memref<1x32x512xf32, #tpu.memory_space<vmem>>, vector<1x32x512xf32>,
    return
  }
  func.func @transform_0(%arg0: i32) -> (i32, i32, i32) {
    %c0_i32 = arith.constant 0 : i32
    %c0_i32_0 = arith.constant 0 : i32
    %c0_i32_1 = arith.constant 0 : i32
    return %arg0, %c0_i32, %c0_i32_0 : i32, i32, i32
  }
  func.func @transform_1(%arg0: i32) -> (i32, i32) {
    %c0_i32 = arith.constant 0 : i32
    %c0_i32_0 = arith.constant 0 : i32
    %c0_i32_1 = arith.constant 0 : i32
    return %c0_i32, %c0_i32_0 : i32, i32
  }
  func.func @transform_2(%arg0: i32) -> (i32, i32) {
    %c0_i32 = arith.constant 0 : i32
    %c0_i32_0 = arith.constant 0 : i32
    %c0_i32_1 = arith.constant 0 : i32
    return %c0_i32, %c0_i32_0 : i32, i32
  }
  func.func @transform_3(%arg0: i32) -> (i32, i32) {
    %c0_i32 = arith.constant 0 : i32
    %c0_i32_0 = arith.constant 0 : i32
    %c0_i32_1 = arith.constant 0 : i32
    return %c0_i32, %c0_i32_0 : i32, i32
  }
  func.func @transform_4(%arg0: i32) -> (i32, i32) {
    %c0_i32 = arith.constant 0 : i32
    %c0_i32_0 = arith.constant 0 : i32
    %c0_i32_1 = arith.constant 0 : i32
    return %c0_i32, %c0_i32_0 : i32, i32
  }
  func.func @transform_5(%arg0: i32) -> (i32, i32) {
    %c0_i32 = arith.constant 0 : i32
    %c0_i32_0 = arith.constant 0 : i32
    %c0_i32_1 = arith.constant 0 : i32
    return %c0_i32, %c0_i32_0 : i32, i32
  }
  func.func @transform_6(%arg0: i32) -> i32 {
    %c0_i32 = arith.constant 0 : i32
    %c0_i32_0 = arith.constant 0 : i32
    return %c0_i32 : i32
  }
  func.func @transform_7(%arg0: i32) -> (i32, i32, i32) {
    %c0_i32 = arith.constant 0 : i32
    %c0_i32_0 = arith.constant 0 : i32
    %c0_i32_1 = arith.constant 0 : i32
    return %arg0, %c0_i32, %c0_i32_0 : i32, i32, i32
  }
}

</mosaic_0001>

<llo_original>
// kernel: tpu_custom_call.1
$region0: #{tpu_custom_call.1}
  #allocation0 [shape = 'u32[]', space=smem, size = 0x4, offset = 0x4, fixed_abs, tag = 'smem constant byte address 0x4 - core index']
  #allocation1 [shape = 'u32[144,128]{1,0:T(1,128)}', space=vmem, size = 0x12000, scoped, tag = 'internal scratch']
  #allocation2 [shape = 'f32[1]{0:T(128)S(6)}', space=smem, size = 0x200, scoped, tag = 'scoped memory for tpu_custom_call.1']
  %s0 = inlined_call_operand.hbm [shape: f32[2,32,512], index: 0, kind: input, shape index: {}]
  %s1 = inlined_call_operand.vmem [shape: f32[32,2], index: 1, kind: input, shape index: {}]
  %s2 = inlined_call_operand.vmem [shape: f32[1,2], index: 2, kind: input, shape index: {}]
  %s3 = inlined_call_operand.vmem [shape: f32[32,2], index: 3, kind: input, shape index: {}]
  %s4 = inlined_call_operand.vmem [shape: f32[32,1], index: 4, kind: input, shape index: {}]
  %s5 = inlined_call_operand.vmem [shape: f32[32,1], index: 5, kind: input, shape index: {}]
  %s6 = inlined_call_operand.<no memory space> [shape: f32[1], index: 6, kind: input, shape index: {}]
  %s7 = inlined_call_operand.hbm [shape: f32[2,32,512], index: 7, kind: output, shape index: {}]
  %s8 = sld [smem:[#allocation0]]
  $region65: #{tpu_custom_call.1} parent=0
    _
  %s10 = ssub.s32 1, %s8
  %s11 = scalar_select 0, %s10, %s8
  %12 = sst [smem:[#allocation2]] %s6
  $region1: #{tpu_custom_call.1} parent=0
    #allocation3 [shape = 'u8[131072]{0}', space=vmem, size = 0x20000, scoped, tag = 'input window, operand 0']
    #allocation4 [shape = 's32[2]{0}', space=sflag, size = 0x8, scoped, tag = 'scoped memory for tpu_custom_call.1']
    #allocation5 [shape = 's32[2]{0}', space=sflag, size = 0x8, scoped, tag = 'scoped memory for tpu_custom_call.1']
    #allocation6 [shape = 'u8[131072]{0}', space=vmem, size = 0x20000, scoped, tag = 'output window, operand 0']
    %13 = vsyncpa [#allocation4], 0
    %s14 = scalar_lea.sflag [#allocation4], 1
    %15 = vsyncpa %s14, 0
    %16 = vsyncpa [#allocation5], 0
    %s17 = scalar_lea.sflag [#allocation5], 1
    %18 = vsyncpa %s17, 0
    loop: start=0, step=1, limit=4
    $region2: #{tpu_custom_call.1} parent=1 // loop_pre_header
      _
    $region3: #{tpu_custom_call.1} parent=1 // loop_header
      %s20 = sphi 0, %s24
      %p21 = scmp.ge.s32.totalorder %s20, 4
      %s30 = sphi 0, %s32
      %s33 = sphi 0, %s30
      %s34 = sphi 0, %s33
      %s50 = sphi 0, %s34
      %s54 = sphi 0, %s54
      %s56 = sphi 0, %s54
      %s57 = sphi 0, %s56
      %s71 = sphi 0, %s57
      %s75 = sphi 0, %s75
      %s77 = sphi 0, %s75
      %s78 = sphi 0, %s77
      %s92 = sphi 0, %s78
      %s96 = sphi 0, %s96
      %s98 = sphi 0, %s96
      %s99 = sphi 0, %s98
      %s113 = sphi 0, %s99
      %s117 = sphi 0, %s117
      %s119 = sphi 0, %s117
      %s120 = sphi 0, %s119
      %s134 = sphi 0, %s120
      %s138 = sphi 0, %s138
      %s140 = sphi 0, %s138
      %s141 = sphi 0, %s140
      %s155 = sphi 0, %s141
      %s159 = sphi 0, %s159
      %s161 = sphi 0, %s159
      %s162 = sphi 0, %s161
      %s176 = sphi 0, %s162
      %s182 = sphi 0, %s184
      %s185 = sphi 0, %s182
      %s186 = sphi 0, %s185
      %s202 = sphi 0, %s186
    $region4: #{tpu_custom_call.1} parent=1 // loop_header_branch
      %23 = sbr.rel (%p21) target = $region8
    $region5: #{tpu_custom_call.1} parent=1 // loop_body
      %s25 = ssub.s32 %s20, 1
      %s26 = ssub.s32 %s20, 2
      %s27 = sadd.s32 %s20, 1
      %s28 = ssub.s32 %s20, %s27
      %p29 = scmp.eq.s32.totalorder %s28, 0
      %s31 = sadd.s32 %s30, 1
      %s32 = scalar_select %p29, %s30, %s31
      %p35 = pneg %p29
      %p36 = scmp.eq.s32.totalorder %s20, 1
      %p37 = por %p35, %p36
      %p38 = scmp.ne.s32.totalorder %s30, %s33
      %p39 = scmp.eq.s32.totalorder %s20, 0
      %p40 = por %p38, %p39
      %p41 = scmp.ne.s32.totalorder %s30, %s33
      %p42 = scmp.eq.s32.totalorder %s25, 1
      %p43 = por %p41, %p42
      %p44 = scmp.ne.s32.totalorder %s33, %s34
      %p45 = scmp.eq.s32.totalorder %s25, 0
      %p46 = por %p44, %p45
      %p47 = scmp.ne.s32.totalorder %s33, %s34
      %p48 = scmp.eq.s32.totalorder %s26, 1
      %p49 = por %p47, %p48
      %p51 = scmp.ne.s32.totalorder %s34, %s50
      %p52 = scmp.eq.s32.totalorder %s26, 0
      %p53 = por %p51, %p52
      %s55 = sadd.s32 %s54, 1
      %p58 = scmp.eq.s32.totalorder %s20, 1
      %p59 = scmp.ne.s32.totalorder %s54, %s56
      %p60 = scmp.eq.s32.totalorder %s20, 0
      %p61 = por %p59, %p60
      %p62 = scmp.ne.s32.totalorder %s54, %s56
      %p63 = scmp.eq.s32.totalorder %s25, 1
      %p64 = por %p62, %p63
      %p65 = scmp.ne.s32.totalorder %s56, %s57
      %p66 = scmp.eq.s32.totalorder %s25, 0
      %p67 = por %p65, %p66
      %p68 = scmp.ne.s32.totalorder %s56, %s57
      %p69 = scmp.eq.s32.totalorder %s26, 1
      %p70 = por %p68, %p69
      %p72 = scmp.ne.s32.totalorder %s57, %s71
      %p73 = scmp.eq.s32.totalorder %s26, 0
      %p74 = por %p72, %p73
      %s76 = sadd.s32 %s75, 1
      %p79 = scmp.eq.s32.totalorder %s20, 1
      %p80 = scmp.ne.s32.totalorder %s75, %s77
      %p81 = scmp.eq.s32.totalorder %s20, 0
      %p82 = por %p80, %p81
      %p83 = scmp.ne.s32.totalorder %s75, %s77
      %p84 = scmp.eq.s32.totalorder %s25, 1
      %p85 = por %p83, %p84
      %p86 = scmp.ne.s32.totalorder %s77, %s78
      %p87 = scmp.eq.s32.totalorder %s25, 0
      %p88 = por %p86, %p87
      %p89 = scmp.ne.s32.totalorder %s77, %s78
      %p90 = scmp.eq.s32.totalorder %s26, 1
      %p91 = por %p89, %p90
      %p93 = scmp.ne.s32.totalorder %s78, %s92
      %p94 = scmp.eq.s32.totalorder %s26, 0
      %p95 = por %p93, %p94
      %s97 = sadd.s32 %s96, 1
      %p100 = scmp.eq.s32.totalorder %s20, 1
      %p101 = scmp.ne.s32.totalorder %s96, %s98
      %p102 = scmp.eq.s32.totalorder %s20, 0
      %p103 = por %p101, %p102
      %p104 = scmp.ne.s32.totalorder %s96, %s98
      %p105 = scmp.eq.s32.totalorder %s25, 1
      %p106 = por %p104, %p105
      %p107 = scmp.ne.s32.totalorder %s98, %s99
      %p108 = scmp.eq.s32.totalorder %s25, 0
      %p109 = por %p107, %p108
      %p110 = scmp.ne.s32.totalorder %s98, %s99
      %p111 = scmp.eq.s32.totalorder %s26, 1
      %p112 = por %p110, %p111
      %p114 = scmp.ne.s32.totalorder %s99, %s113
      %p115 = scmp.eq.s32.totalorder %s26, 0
      %p116 = por %p114, %p115
      %s118 = sadd.s32 %s117, 1
      %p121 = scmp.eq.s32.totalorder %s20, 1
      %p122 = scmp.ne.s32.totalorder %s117, %s119
      %p123 = scmp.eq.s32.totalorder %s20, 0
      %p124 = por %p122, %p123
      %p125 = scmp.ne.s32.totalorder %s117, %s119
      %p126 = scmp.eq.s32.totalorder %s25, 1
      %p127 = por %p125, %p126
      %p128 = scmp.ne.s32.totalorder %s119, %s120
      %p129 = scmp.eq.s32.totalorder %s25, 0
      %p130 = por %p128, %p129
      %p131 = scmp.ne.s32.totalorder %s119, %s120
      %p132 = scmp.eq.s32.totalorder %s26, 1
      %p133 = por %p131, %p132
      %p135 = scmp.ne.s32.totalorder %s120, %s134
      %p136 = scmp.eq.s32.totalorder %s26, 0
      %p137 = por %p135, %p136
      %s139 = sadd.s32 %s138, 1
      %p142 = scmp.eq.s32.totalorder %s20, 1
      %p143 = scmp.ne.s32.totalorder %s138, %s140
      %p144 = scmp.eq.s32.totalorder %s20, 0
      %p145 = por %p143, %p144
      %p146 = scmp.ne.s32.totalorder %s138, %s140
      %p147 = scmp.eq.s32.totalorder %s25, 1
      %p148 = por %p146, %p147
      %p149 = scmp.ne.s32.totalorder %s140, %s141
      %p150 = scmp.eq.s32.totalorder %s25, 0
      %p151 = por %p149, %p150
      %p152 = scmp.ne.s32.totalorder %s140, %s141
      %p153 = scmp.eq.s32.totalorder %s26, 1
      %p154 = por %p152, %p153
      %p156 = scmp.ne.s32.totalorder %s141, %s155
      %p157 = scmp.eq.s32.totalorder %s26, 0
      %p158 = por %p156, %p157
      %s160 = sadd.s32 %s159, 1
      %p163 = scmp.eq.s32.totalorder %s20, 1
      %p164 = scmp.ne.s32.totalorder %s159, %s161
      %p165 = scmp.eq.s32.totalorder %s20, 0
      %p166 = por %p164, %p165
      %p167 = scmp.ne.s32.totalorder %s159, %s161
      %p168 = scmp.eq.s32.totalorder %s25, 1
      %p169 = por %p167, %p168
      %p170 = scmp.ne.s32.totalorder %s161, %s162
      %p171 = scmp.eq.s32.totalorder %s25, 0
      %p172 = por %p170, %p171
      %p173 = scmp.ne.s32.totalorder %s161, %s162
      %p174 = scmp.eq.s32.totalorder %s26, 1
      %p175 = por %p173, %p174
      %p177 = scmp.ne.s32.totalorder %s162, %s176
      %p178 = scmp.eq.s32.totalorder %s26, 0
      %p179 = por %p177, %p178
      %s180 = ssub.s32 %s20, %s27
      %p181 = scmp.eq.s32.totalorder %s180, 0
      %s183 = sadd.s32 %s182, 1
      %s184 = scalar_select %p181, %s182, %s183
      %p187 = pneg %p181
      %p188 = scmp.eq.s32.totalorder %s20, 1
      %p189 = por %p187, %p188
      %p190 = scmp.ne.s32.totalorder %s182, %s185
      %p191 = scmp.eq.s32.totalorder %s20, 0
      %p192 = por %p190, %p191
      %p193 = scmp.ne.s32.totalorder %s182, %s185
      %p194 = scmp.eq.s32.totalorder %s25, 1
      %p195 = por %p193, %p194
      %p196 = scmp.ne.s32.totalorder %s185, %s186
      %p197 = scmp.eq.s32.totalorder %s25, 0
      %p198 = por %p196, %p197
      %p199 = scmp.ne.s32.totalorder %s185, %s186
      %p200 = scmp.eq.s32.totalorder %s26, 1
      %p201 = por %p199, %p200
      %p203 = scmp.ne.s32.totalorder %s186, %s202
      %p204 = scmp.eq.s32.totalorder %s26, 0
      %p205 = por %p203, %p204
      %p206 = scmp.le.s32.totalorder 1, %s20
      %p207 = scmp.lt.s32.totalorder %s20, 3
      %p208 = pnand %p206, %p207
      %p209 = pneg %p208
      // Predicated region
      $region9: #{tpu_custom_call.1} parent=5 // pred_check
        _
      $region10: #{tpu_custom_call.1} parent=5 // pred_check_branch
        %211 = sbr.rel (%p208) target = $region12
      $region11: #{tpu_custom_call.1} parent=5 // pred_region
        %s212 = ssub.s32 %s20, 1
        // Predicated region
        $region13: #{tpu_custom_call.1} parent=11 // pred_check
          %p213 = pneg %p67
        $region14: #{tpu_custom_call.1} parent=11 // pred_check_branch
          %215 = sbr.rel (%p213) target = $region16
        $region15: #{tpu_custom_call.1} parent=11 // pred_region
          _
        $region16: #{tpu_custom_call.1} parent=11 // pred_fallthru
          _
        // Predicated region
        $region17: #{tpu_custom_call.1} parent=11 // pred_check
          %p216 = pneg %p88
        $region18: #{tpu_custom_call.1} parent=11 // pred_check_branch
          %218 = sbr.rel (%p216) target = $region20
        $region19: #{tpu_custom_call.1} parent=11 // pred_region
          _
        $region20: #{tpu_custom_call.1} parent=11 // pred_fallthru
          _
        // Predicated region
        $region21: #{tpu_custom_call.1} parent=11 // pred_check
          %p219 = pneg %p109
        $region22: #{tpu_custom_call.1} parent=11 // pred_check_branch
          %221 = sbr.rel (%p219) target = $region24
        $region23: #{tpu_custom_call.1} parent=11 // pred_region
          _
        $region24: #{tpu_custom_call.1} parent=11 // pred_fallthru
          _
        // Predicated region
        $region25: #{tpu_custom_call.1} parent=11 // pred_check
          %p222 = pneg %p130
        $region26: #{tpu_custom_call.1} parent=11 // pred_check_branch
          %224 = sbr.rel (%p222) target = $region28
        $region27: #{tpu_custom_call.1} parent=11 // pred_region
          _
        $region28: #{tpu_custom_call.1} parent=11 // pred_fallthru
          _
        // Predicated region
        $region29: #{tpu_custom_call.1} parent=11 // pred_check
          %p225 = pneg %p151
        $region30: #{tpu_custom_call.1} parent=11 // pred_check_branch
          %227 = sbr.rel (%p225) target = $region32
        $region31: #{tpu_custom_call.1} parent=11 // pred_region
          _
        $region32: #{tpu_custom_call.1} parent=11 // pred_fallthru
          _
        // Predicated region
        $region33: #{tpu_custom_call.1} parent=11 // pred_check
          %p228 = pneg %p172
        $region34: #{tpu_custom_call.1} parent=11 // pred_check_branch
          %230 = sbr.rel (%p228) target = $region36
        $region35: #{tpu_custom_call.1} parent=11 // pred_region
          _
        $region36: #{tpu_custom_call.1} parent=11 // pred_fallthru
          _
      $region12: #{tpu_custom_call.1} parent=5 // pred_fallthru
        _
      %p231 = scmp.lt.s32.totalorder %s20, 2
      // Predicated region
      $region37: #{tpu_custom_call.1} parent=5 // pred_check
        %p232 = pneg %p231
      $region38: #{tpu_custom_call.1} parent=5 // pred_check_branch
        %234 = sbr.rel (%p232) target = $region40
      $region39: #{tpu_custom_call.1} parent=5 // pred_region
        // Predicated region
        $region41: #{tpu_custom_call.1} parent=39 // pred_check
          %p235 = pneg %p40
        $region42: #{tpu_custom_call.1} parent=39 // pred_check_branch
          %237 = sbr.rel (%p235) target = $region44
        $region43: #{tpu_custom_call.1} parent=39 // pred_region
          %s238 = sand.u32 %s30, 1
          %s239 = scalar_lea.sflag [#allocation4], %s238
          %s240 = sand.u32 %s30, 1
          %s241 = smul.addr %s240, 128
          %s242 = scalar_lea.vmem [#allocation3], %s241
          %s244 = ssub.s32 2048, 2048
          %245 = vsyncadd %s239, %s244
          %s246 = smul.addr %s20, 16
          %s247 = smul.addr %s246, 128
          %s248 = scalar_lea.hbm %s0, %s247
          %s249 = sshll.u32 %s242, 4
          %s250 = int_to_ptr.vmem [resolvable:$true] %s249
          %255 = dma.hbm_to_vmem [thread:$0]  %s248, 2048, %s250, %s239, 512, 512, 32
        $region44: #{tpu_custom_call.1} parent=39 // pred_fallthru
          _
      $region40: #{tpu_custom_call.1} parent=5 // pred_fallthru
        _
      %p256 = scmp.le.s32.totalorder 1, %s20
      %p257 = scmp.lt.s32.totalorder %s20, 3
      %p258 = pnand %p256, %p257
      %p259 = pneg %p258
      // Predicated region
      $region45: #{tpu_custom_call.1} parent=5 // pred_check
        _
      $region46: #{tpu_custom_call.1} parent=5 // pred_check_branch
        %261 = sbr.rel (%p258) target = $region48
      $region47: #{tpu_custom_call.1} parent=5 // pred_region
        %s262 = ssub.s32 %s20, 1
        %s263 = sand.u32 %s33, 1
        %s264 = scalar_lea.sflag [#allocation4], %s263
        %s265 = sand.u32 %s33, 1
        %s266 = smul.addr %s265, 128
        %s267 = scalar_lea.vmem [#allocation3], %s266
        // Predicated region
        $region49: #{tpu_custom_call.1} parent=47 // pred_check
          %p268 = pneg %p46
        $region50: #{tpu_custom_call.1} parent=47 // pred_check_branch
          %270 = sbr.rel (%p268) target = $region52
        $region51: #{tpu_custom_call.1} parent=47 // pred_region
          %271 = dma.done %s264, 2048
        $region52: #{tpu_custom_call.1} parent=47 // pred_fallthru
          _
        %s272 = sand.u32 %s33, 1
        %s273 = scalar_lea.sflag [#allocation4], %s272
        %s274 = sand.u32 %s33, 1
        %s275 = smul.addr %s274, 128
        %s276 = scalar_lea.vmem [#allocation3], %s275
        %p277 = pneg %p46
        %p278 = pneg %p43
        %p279 = pneg %p67
        %p280 = pneg %p64
        %p281 = pneg %p88
        %p282 = pneg %p85
        %p283 = pneg %p109
        %p284 = pneg %p106
        %p285 = pneg %p130
        %p286 = pneg %p127
        %p287 = pneg %p151
        %p288 = pneg %p148
        %p289 = pneg %p172
        %p290 = pneg %p169
        %p291 = pneg %p198
        %p292 = pneg %p195
        %s293 = sand.u32 %s185, 1
        %s294 = scalar_lea.sflag [#allocation5], %s293
        %s295 = sand.u32 %s185, 1
        %s296 = smul.addr %s295, 128
        %s297 = scalar_lea.vmem [#allocation6], %s296
        %v298 = vld [vmem:[%s267] sm:$0xff]
        %v299 = vld [vmem:[%s267 + $0x8] sm:$0xff]
        %v300 = vld [vmem:[%s267 + $0x10] sm:$0xff]
        %v301 = vld [vmem:[%s267 + $0x18] sm:$0xff]
        %v302 = vld [vmem:[%s267 + $0x20] sm:$0xff]
        %v303 = vld [vmem:[%s267 + $0x28] sm:$0xff]
        %v304 = vld [vmem:[%s267 + $0x30] sm:$0xff]
        %v305 = vld [vmem:[%s267 + $0x38] sm:$0xff]
        %v306 = vld [vmem:[%s267 + $0x40] sm:$0xff]
        %v307 = vld [vmem:[%s267 + $0x48] sm:$0xff]
        %v308 = vld [vmem:[%s267 + $0x50] sm:$0xff]
        %v309 = vld [vmem:[%s267 + $0x58] sm:$0xff]
        %v310 = vld [vmem:[%s267 + $0x60] sm:$0xff]
        %v311 = vld [vmem:[%s267 + $0x68] sm:$0xff]
        %v312 = vld [vmem:[%s267 + $0x70] sm:$0xff]
        %v313 = vld [vmem:[%s267 + $0x78] sm:$0xff]
        %v314 = vadd.f32 %v298, %v299
        %v315 = vadd.f32 %v314, %v300
        %v316 = vadd.f32 %v315, %v301
        %317 = vadd.xlane.f32.xlu0 %v316
        %v318 = vpop.xlane.xlu0 %317
        %v319 = vadd.f32 %v302, %v303
        %v320 = vadd.f32 %v319, %v304
        %v321 = vadd.f32 %v320, %v305
        %322 = vadd.xlane.f32.xlu0 %v321
        %v323 = vpop.xlane.xlu0 %322
        %v324 = vadd.f32 %v306, %v307
        %v325 = vadd.f32 %v324, %v308
        %v326 = vadd.f32 %v325, %v309
        %327 = vadd.xlane.f32.xlu0 %v326
        %v328 = vpop.xlane.xlu0 %327
        %v329 = vadd.f32 %v310, %v311
        %v330 = vadd.f32 %v329, %v312
        %v331 = vadd.f32 %v330, %v313
        %332 = vadd.xlane.f32.xlu0 %v331
        %v333 = vpop.xlane.xlu0 %332
        %v334 = vmul.f32 %v318, 0.001953125
        %v335 = vmul.f32 %v323, 0.001953125
        %v336 = vmul.f32 %v328, 0.001953125
        %v337 = vmul.f32 %v333, 0.001953125
        %v338 = vld [vmem:[%s1] sm:$0xff]
        %v339 = vld [vmem:[%s1 + $0x8] sm:$0xff]
        %v340 = vld [vmem:[%s1 + $0x10] sm:$0xff]
        %v341 = vld [vmem:[%s1 + $0x18] sm:$0xff]
        %v342 = vmul.f32 %v338, %v334
        %v343 = vmul.f32 %v339, %v335
        %v344 = vmul.f32 %v340, %v336
        %v345 = vmul.f32 %v341, %v337
        %vm346 = vcmask 15360
        %v347 = vsel %vm346, %v342, 0.0
        %v348 = vsel %vm346, %v343, 0.0
        %v349 = vadd.f32 %v347, %v348
        %v350 = vsel %vm346, %v344, 0.0
        %v351 = vadd.f32 %v349, %v350
        %v352 = vsel %vm346, %v345, 0.0
        %v353 = vadd.f32 %v351, %v352
        %v354 = vrot.slane %v353, 4
        %v355 = vadd.f32 %v353, %v354
        %v356 = vrot.slane %v355, 2
        %v357 = vadd.f32 %v355, %v356
        %v358 = vrot.slane %v357, 1
        %v359 = vadd.f32 %v357, %v358
        %v360 = vld [vmem:[%s2] sm:$0x1]
        %v361 = vadd.f32 %v359, %v360
        %v362 = vtanh.pop %v361
        %v363 = vld [vmem:[%s3] sm:$0xff]
        %v364 = vld [vmem:[%s3 + $0x8] sm:$0xff]
        %v365 = vld [vmem:[%s3 + $0x10] sm:$0xff]
        %v366 = vld [vmem:[%s3 + $0x18] sm:$0xff]
        %v367 = vlaneseq
        %v368 = vshrl.u32 %v367, 7
        %v369 = vsub.s32 0, %v368
        %v370 = vrot.slane %v362, %v369
        %v371 = vmul.f32 %v363, %v370
        %v372 = vmul.f32 %v364, %v370
        %v373 = vmul.f32 %v365, %v370
        %v374 = vmul.f32 %v366, %v370
        %v375 = vsel %vm346, %v371, 0.0
        %376 = vadd.xlane.f32.xlu0 %v375
        %v377 = vpop.xlane.xlu0 %376
        %v378 = vsel %vm346, %v372, 0.0
        %379 = vadd.xlane.f32.xlu0 %v378
        %v380 = vpop.xlane.xlu0 %379
        %v381 = vsel %vm346, %v373, 0.0
        %382 = vadd.xlane.f32.xlu0 %v381
        %v383 = vpop.xlane.xlu0 %382
        %v384 = vsel %vm346, %v374, 0.0
        %385 = vadd.xlane.f32.xlu0 %v384
        %v386 = vpop.xlane.xlu0 %385
        %v387 = vld [vmem:[%s4] sm:$0xff]
        %v388 = vld [vmem:[%s4 + $0x8] sm:$0xff]
        %v389 = vld [vmem:[%s4 + $0x10] sm:$0xff]
        %v390 = vld [vmem:[%s4 + $0x18] sm:$0xff]
        %v391 = vadd.f32 %v377, %v387
        %v392 = vadd.f32 %v380, %v388
        %v393 = vadd.f32 %v383, %v389
        %v394 = vadd.f32 %v386, %v390
        %v395 = vxor.u32 %v391, 2147483648
        %v396 = vxor.u32 %v392, 2147483648
        %v397 = vxor.u32 %v393, 2147483648
        %v398 = vxor.u32 %v394, 2147483648
        %v399 = vmul.f32 %v395, 1.442695
        %v400 = vpow.pop %v399
        %v401 = vmul.f32 %v396, 1.442695
        %v402 = vpow.pop %v401
        %v403 = vmul.f32 %v397, 1.442695
        %v404 = vpow.pop %v403
        %v405 = vmul.f32 %v398, 1.442695
        %v406 = vpow.pop %v405
        %v407 = vadd.f32 %v400, 1.0
        %v408 = vadd.f32 %v402, 1.0
        %v409 = vadd.f32 %v404, 1.0
        %v410 = vadd.f32 %v406, 1.0
        %v411 = vrcp.pop %v407
        %v412 = vmul.f32 1.0, %v411
        %v413 = vrcp.pop %v408
        %v414 = vmul.f32 1.0, %v413
        %v415 = vrcp.pop %v409
        %v416 = vmul.f32 1.0, %v415
        %v417 = vrcp.pop %v410
        %v418 = vmul.f32 1.0, %v417
        %v419 = vld [vmem:[%s5] sm:$0xff]
        %v420 = vld [vmem:[%s5 + $0x8] sm:$0xff]
        %v421 = vld [vmem:[%s5 + $0x10] sm:$0xff]
        %v422 = vld [vmem:[%s5 + $0x18] sm:$0xff]
        %424 = vset.pattern.permute.xlu0 0
        %425 = vperm.xlu0 %424, %v419
        %v426 = vpop.permute.xlu0 %425
        %429 = vset.pattern.permute.xlu0 0
        %430 = vperm.xlu0 %429, %v420
        %v431 = vpop.permute.xlu0 %430
        %434 = vset.pattern.permute.xlu0 0
        %435 = vperm.xlu0 %434, %v421
        %v436 = vpop.permute.xlu0 %435
        %439 = vset.pattern.permute.xlu0 0
        %440 = vperm.xlu0 %439, %v422
        %v441 = vpop.permute.xlu0 %440
        %v443 = vmul.f32 %v298, %v426
        %v444 = vmul.f32 %v299, %v426
        %v445 = vmul.f32 %v300, %v426
        %v446 = vmul.f32 %v301, %v426
        %v447 = vmul.f32 %v302, %v431
        %v448 = vmul.f32 %v303, %v431
        %v449 = vmul.f32 %v304, %v431
        %v450 = vmul.f32 %v305, %v431
        %v451 = vmul.f32 %v306, %v436
        %v452 = vmul.f32 %v307, %v436
        %v453 = vmul.f32 %v308, %v436
        %v454 = vmul.f32 %v309, %v436
        %v455 = vmul.f32 %v310, %v441
        %v456 = vmul.f32 %v311, %v441
        %v457 = vmul.f32 %v312, %v441
        %v458 = vmul.f32 %v313, %v441
        %v459 = vadd.f32 %v443, %v447
        %v460 = vadd.f32 %v459, %v451
        %v461 = vadd.f32 %v460, %v455
        %v462 = vrot.slane %v461, 4
        %v463 = vadd.f32 %v461, %v462
        %v464 = vrot.slane %v463, 2
        %v465 = vadd.f32 %v463, %v464
        %v466 = vrot.slane %v465, 1
        %v467 = vadd.f32 %v465, %v466
        %v468 = vadd.f32 %v444, %v448
        %v469 = vadd.f32 %v468, %v452
        %v470 = vadd.f32 %v469, %v456
        %v471 = vrot.slane %v470, 4
        %v472 = vadd.f32 %v470, %v471
        %v473 = vrot.slane %v472, 2
        %v474 = vadd.f32 %v472, %v473
        %v475 = vrot.slane %v474, 1
        %v476 = vadd.f32 %v474, %v475
        %v477 = vadd.f32 %v445, %v449
        %v478 = vadd.f32 %v477, %v453
        %v479 = vadd.f32 %v478, %v457
        %v480 = vrot.slane %v479, 4
        %v481 = vadd.f32 %v479, %v480
        %v482 = vrot.slane %v481, 2
        %v483 = vadd.f32 %v481, %v482
        %v484 = vrot.slane %v483, 1
        %v485 = vadd.f32 %v483, %v484
        %v486 = vadd.f32 %v446, %v450
        %v487 = vadd.f32 %v486, %v454
        %v488 = vadd.f32 %v487, %v458
        %v489 = vrot.slane %v488, 4
        %v490 = vadd.f32 %v488, %v489
        %v491 = vrot.slane %v490, 2
        %v492 = vadd.f32 %v490, %v491
        %v493 = vrot.slane %v492, 1
        %v494 = vadd.f32 %v492, %v493
        %s495 = sld [smem:[#allocation2]]
        %v496 = vstv %s495
        %v497 = vadd.f32 %v467, %v496
        %v498 = vadd.f32 %v476, %v496
        %v499 = vadd.f32 %v485, %v496
        %v500 = vadd.f32 %v494, %v496
        %v501 = vxor.u32 %v497, 2147483648
        %v502 = vxor.u32 %v498, 2147483648
        %v503 = vxor.u32 %v499, 2147483648
        %v504 = vxor.u32 %v500, 2147483648
        %v505 = vmul.f32 %v501, 1.442695
        %v506 = vpow.pop %v505
        %v507 = vmul.f32 %v502, 1.442695
        %v508 = vpow.pop %v507
        %v509 = vmul.f32 %v503, 1.442695
        %v510 = vpow.pop %v509
        %v511 = vmul.f32 %v504, 1.442695
        %v512 = vpow.pop %v511
        %v513 = vadd.f32 %v506, 1.0
        %v514 = vadd.f32 %v508, 1.0
        %v515 = vadd.f32 %v510, 1.0
        %v516 = vadd.f32 %v512, 1.0
        %v517 = vrcp.pop %v513
        %v518 = vmul.f32 1.0, %v517
        %v519 = vrcp.pop %v514
        %v520 = vmul.f32 1.0, %v519
        %v521 = vrcp.pop %v515
        %v522 = vmul.f32 1.0, %v521
        %v523 = vrcp.pop %v516
        %v524 = vmul.f32 1.0, %v523
        %526 = vset.pattern.permute.xlu0 0
        %527 = vperm.xlu0 %526, %v412
        %v528 = vpop.permute.xlu0 %527
        %531 = vset.pattern.permute.xlu0 0
        %532 = vperm.xlu0 %531, %v414
        %v533 = vpop.permute.xlu0 %532
        %536 = vset.pattern.permute.xlu0 0
        %537 = vperm.xlu0 %536, %v416
        %v538 = vpop.permute.xlu0 %537
        %541 = vset.pattern.permute.xlu0 0
        %542 = vperm.xlu0 %541, %v418
        %v543 = vpop.permute.xlu0 %542
        %v545 = vadd.f32 %v528, %v518
        %v546 = vadd.f32 %v528, %v520
        %v547 = vadd.f32 %v528, %v522
        %v548 = vadd.f32 %v528, %v524
        %v549 = vadd.f32 %v533, %v518
        %v550 = vadd.f32 %v533, %v520
        %v551 = vadd.f32 %v533, %v522
        %v552 = vadd.f32 %v533, %v524
        %v553 = vadd.f32 %v538, %v518
        %v554 = vadd.f32 %v538, %v520
        %v555 = vadd.f32 %v538, %v522
        %v556 = vadd.f32 %v538, %v524
        %v557 = vadd.f32 %v543, %v518
        %v558 = vadd.f32 %v543, %v520
        %v559 = vadd.f32 %v543, %v522
        %v560 = vadd.f32 %v543, %v524
        %v561 = vmul.f32 %v298, %v545
        %v562 = vmul.f32 %v299, %v546
        %v563 = vmul.f32 %v300, %v547
        %v564 = vmul.f32 %v301, %v548
        %v565 = vmul.f32 %v302, %v549
        %v566 = vmul.f32 %v303, %v550
        %v567 = vmul.f32 %v304, %v551
        %v568 = vmul.f32 %v305, %v552
        %v569 = vmul.f32 %v306, %v553
        %v570 = vmul.f32 %v307, %v554
        %v571 = vmul.f32 %v308, %v555
        %v572 = vmul.f32 %v309, %v556
        %v573 = vmul.f32 %v310, %v557
        %v574 = vmul.f32 %v311, %v558
        %v575 = vmul.f32 %v312, %v559
        %v576 = vmul.f32 %v313, %v560
        %577 = vst [vmem:[%s297] sm:$0xff] %v561
        %578 = vst [vmem:[%s297 + $0x8] sm:$0xff] %v562
        %579 = vst [vmem:[%s297 + $0x10] sm:$0xff] %v563
        %580 = vst [vmem:[%s297 + $0x18] sm:$0xff] %v564
        %581 = vst [vmem:[%s297 + $0x20] sm:$0xff] %v565
        %582 = vst [vmem:[%s297 + $0x28] sm:$0xff] %v566
        %583 = vst [vmem:[%s297 + $0x30] sm:$0xff] %v567
        %584 = vst [vmem:[%s297 + $0x38] sm:$0xff] %v568
        %585 = vst [vmem:[%s297 + $0x40] sm:$0xff] %v569
        %586 = vst [vmem:[%s297 + $0x48] sm:$0xff] %v570
        %587 = vst [vmem:[%s297 + $0x50] sm:$0xff] %v571
        %588 = vst [vmem:[%s297 + $0x58] sm:$0xff] %v572
        %589 = vst [vmem:[%s297 + $0x60] sm:$0xff] %v573
        %590 = vst [vmem:[%s297 + $0x68] sm:$0xff] %v574
        %591 = vst [vmem:[%s297 + $0x70] sm:$0xff] %v575
        %592 = vst [vmem:[%s297 + $0x78] sm:$0xff] %v576
        %s593 = sand.u32 %s185, 1
        %s594 = scalar_lea.sflag [#allocation5], %s593
        %s595 = sand.u32 %s185, 1
        %s596 = smul.addr %s595, 128
        %s597 = scalar_lea.vmem [#allocation6], %s596
        // Predicated region
        $region53: #{tpu_custom_call.1} parent=47 // pred_check
          %p598 = pneg %p195
        $region54: #{tpu_custom_call.1} parent=47 // pred_check_branch
          %600 = sbr.rel (%p598) target = $region56
        $region55: #{tpu_custom_call.1} parent=47 // pred_region
          %s602 = ssub.s32 2048, 2048
          %603 = vsyncadd %s594, %s602
          %s604 = smul.addr %s25, 16
          %s605 = smul.addr %s604, 128
          %s606 = scalar_lea.hbm %s7, %s605
          %s607 = sshll.u32 %s597, 4
          %s608 = int_to_ptr.vmem [resolvable:$true] %s607
          %613 = dma.vmem_to_hbm [thread:$0]  %s608, 2048, %s606, %s594, 512, 512, 32
        $region56: #{tpu_custom_call.1} parent=47 // pred_fallthru
          _
      $region48: #{tpu_custom_call.1} parent=5 // pred_fallthru
        _
      %p614 = scmp.le.s32.totalorder 2, %s20
      // Predicated region
      $region57: #{tpu_custom_call.1} parent=5 // pred_check
        %p615 = pneg %p614
      $region58: #{tpu_custom_call.1} parent=5 // pred_check_branch
        %617 = sbr.rel (%p615) target = $region60
      $region59: #{tpu_custom_call.1} parent=5 // pred_region
        %s618 = ssub.s32 %s20, 2
        // Predicated region
        $region61: #{tpu_custom_call.1} parent=59 // pred_check
          %p619 = pneg %p201
        $region62: #{tpu_custom_call.1} parent=59 // pred_check_branch
          %621 = sbr.rel (%p619) target = $region64
        $region63: #{tpu_custom_call.1} parent=59 // pred_region
          %s622 = sand.u32 %s186, 1
          %s623 = scalar_lea.sflag [#allocation5], %s622
          %s624 = sand.u32 %s186, 1
          %s625 = smul.addr %s624, 128
          %s626 = scalar_lea.vmem [#allocation6], %s625
          %627 = dma.done %s623, 2048
        $region64: #{tpu_custom_call.1} parent=59 // pred_fallthru
          _
      $region60: #{tpu_custom_call.1} parent=5 // pred_fallthru
        _
    $region6: #{tpu_custom_call.1} parent=1 // loop_footer
      %s24 = sadd.s32 1, %s20
    $region7: #{tpu_custom_call.1} parent=1 // loop_footer_branch
      %19 = sbr.rel target = $region3
    $region8: #{tpu_custom_call.1} parent=1 // loop_exit
      _
    %628 = vsyncpa [#allocation4], 1
    %s629 = scalar_lea.sflag [#allocation4], 1
    %630 = vsyncpa %s629, 1
    %631 = vsyncpa [#allocation5], 1
    %s632 = scalar_lea.sflag [#allocation5], 1
    %633 = vsyncpa %s632, 1

</llo_original>
